<compile_context>
chip_gen: v7x
topology: tpu7x:2x2x1
jax: 0.10.0
libtpu: 0.0.40
codegen_flags: <defaults>
</compile_context>

<pallas_src>
import functools

import jax
import jax.numpy as jnp
from jax.experimental import pallas as pl
from jax.experimental.pallas import tpu as pltpu

EPS = 1e-8


def _round_up(x, m):
    return (x + m - 1) // m * m


def time_encoder_kernel(x_ref, w_ref, b_ref, feat_ref, norm_ref, *, M, Mp):
    """One (batch, T-tile) grid step.

    x_ref:    (1, tT, N)   f32 frames
    w_ref:    (N, 2*Mp)    f32 [Wc | Wg], each half zero-padded to Mp lanes
    b_ref:    (1, 2*Mp)    f32 [bc | bg], zero-padded the same way
    feat_ref: (1, tT, M)   f32 encoded features (dense, natural width)
    norm_ref: (1, tT, 1)   f32 per-frame L2 norm
    """
    x = x_ref[0]                                                # [tT, N]
    norm = jnp.sqrt(jnp.sum(x * x, axis=-1, keepdims=True))     # [tT, 1] == torch.norm
    xn = x * (1.0 / (norm + EPS))                               # same eps placement as torch

    # Fused matmul: [tT, N] @ [N, 2*Mp] -> [tT, 2*Mp], f32 accumulation on the MXU.
    y = jnp.dot(xn, w_ref[...], preferred_element_type=jnp.float32) + b_ref[...]

    conv = jnp.maximum(y[:, :Mp], 0.0)      # split at Mp: 128-aligned, no cross-lane shift
    gate = jax.nn.sigmoid(y[:, Mp:])
    feat = conv * gate                      # [tT, Mp]

    feat_ref[0] = feat[:, :M].astype(feat_ref.dtype)   # prefix slice -> masked store only
    norm_ref[0] = norm.astype(norm_ref.dtype)


def _choose_tile_T(T, N, M, Mp):
    """Pick the frame-tile size from a VMEM budget instead of a fixed cap."""
    # Per-frame-row live f32 bytes: double-buffered input tile + x/xn temporaries
    # (~4*N), output tiles (~2*M), and matmul/activation temporaries of width 2*Mp.
    bytes_per_row = 4 * (4 * N + 2 * M + 8 * Mp + 2)
    # Weights/bias are resident (and double-buffered by default); budget around them.
    weight_resident = 2 * 4 * (N * 2 * Mp + 2 * Mp)
    tile_budget = max(4 * 1024 * 1024, 40 * 1024 * 1024 - weight_resident)
    tT_vmem = max(8, (tile_budget // bytes_per_row) // 8 * 8)
    # Keep >= ~8 tiles along T when T is long (pipeline depth; v7x dual-TC sharding).
    tT_depth = max(8, _round_up(-(-T // 8), 8))
    tT = min(tT_vmem, tT_depth)
    if tT >= T:
        return T        # single full-extent tile: no padding, no output slicing
    return tT


def time_encoder(waveform, params, *, N, O, M):
    """waveform: [B, L] float32 -> (x [B, T, M], x_norm [B, T, 1])."""
    B, L = waveform.shape
    assert L >= N, "waveform shorter than one frame"
    T = (L - N) // O + 1

    # Pad each feature half to a lane multiple (only the packed weight uses Mp; the
    # feature output stays at its natural width M).
    Mp = _round_up(M, 128)

    tT = _choose_tile_T(T, N, M, Mp)
    T_pad = T if tT == T else _round_up(T, tT)

    # ---- unfold via strided slices (no gather); pad the waveform, not the frames ----
    L_need = (T_pad - 1) * O + N
    wav = waveform if L_need <= L else jnp.pad(waveform, ((0, 0), (0, L_need - L)))
    if N % O == 0:
        k = N // O
        parts = [
            jax.lax.slice_in_dim(wav, j * O, j * O + T_pad * O, axis=1).reshape(B, T_pad, O)
            for j in range(k)
        ]
        frames = jnp.concatenate(parts, axis=2)                 # [B, T_pad, N]
    else:
        idx = jnp.arange(T_pad)[:, None] * O + jnp.arange(N)[None, :]
        frames = jnp.take(wav, idx, axis=1)                     # fallback when O doesn't divide N

    # ---- pack weights: [Wc | Wg], each half zero-padded to Mp lanes, f32 ----
    wc, bc, wg, bg = params                                     # [N,M], [1,M], [N,M], [1,M]
    f32 = jnp.float32
    wc_p = jnp.zeros((N, Mp), f32).at[:, :M].set(wc.astype(f32))
    wg_p = jnp.zeros((N, Mp), f32).at[:, :M].set(wg.astype(f32))
    w_cat = jnp.concatenate([wc_p, wg_p], axis=1)               # [N, 2*Mp]
    bc_p = jnp.zeros((1, Mp), f32).at[:, :M].set(bc.astype(f32))
    bg_p = jnp.zeros((1, Mp), f32).at[:, :M].set(bg.astype(f32))
    b_cat = jnp.concatenate([bc_p, bg_p], axis=1)               # [1, 2*Mp]

    feat, norm = pl.pallas_call(
        functools.partial(time_encoder_kernel, M=M, Mp=Mp),
        out_shape=(
            jax.ShapeDtypeStruct((B, T_pad, M), jnp.float32),
            jax.ShapeDtypeStruct((B, T_pad, 1), jnp.float32),
        ),
        grid_spec=pltpu.PrefetchScalarGridSpec(
            num_scalar_prefetch=0,
            grid=(B, T_pad // tT),
            in_specs=[
                pl.BlockSpec((1, tT, N), lambda b, t: (b, t, 0)),
                pl.BlockSpec((N, 2 * Mp), lambda b, t: (0, 0)),
                pl.BlockSpec((1, 2 * Mp), lambda b, t: (0, 0)),
            ],
            out_specs=[
                pl.BlockSpec((1, tT, M), lambda b, t: (b, t, 0)),
                pl.BlockSpec((1, tT, 1), lambda b, t: (b, t, 0)),
            ],
        ),
        compiler_params=pltpu.CompilerParams(
            dimension_semantics=("parallel", "parallel"),
            vmem_limit_bytes=56 * 1024 * 1024,
        ),
    )(frames, w_cat, b_cat)

    if T_pad != T:                # only when T-tiling forced padding
        feat = feat[:, :T]
        norm = norm[:, :T]
    return feat, norm


def init_params(key, N, M):
    """Deterministic init mimicking torch.nn.Linear default (uniform +-1/sqrt(N))."""
    bound = 1.0 / jnp.sqrt(jnp.float32(N))
    k1, k2, k3, k4 = jax.random.split(key, 4)
    wc = jax.random.uniform(k1, (N, M), jnp.float32, -bound, bound)
    bc = jax.random.uniform(k2, (1, M), jnp.float32, -bound, bound)
    wg = jax.random.uniform(k3, (N, M), jnp.float32, -bound, bound)
    bg = jax.random.uniform(k4, (1, M), jnp.float32, -bound, bound)
    return wc, bc, wg, bg


if __name__ == "__main__":
    # Small shapes consistent with the module: frame size N, hop O, feature dim M.
    B, N, O, M = 2, 16, 8, 32
    T = 8
    L = (T - 1) * O + N  # 72 samples -> 8 overlapping frames

    key = jax.random.PRNGKey(0)
    kw, kp = jax.random.split(key)
    waveform = jax.random.normal(kw, (B, L), jnp.float32)
    params = init_params(kp, N, M)

    x, x_norm = time_encoder(waveform, params, N=N, O=O, M=M)
    jax.block_until_ready((x, x_norm))

    # lightweight sanity check against a pure-JAX f32 reference
    frames = jnp.stack([waveform[:, t * O: t * O + N] for t in range(T)], axis=1)
    ref_norm = jnp.linalg.norm(frames, axis=-1, keepdims=True)
    xn = frames / (ref_norm + EPS)
    wc, bc, wg, bg = params
    ref = jnp.maximum(xn @ wc + bc, 0.0) * jax.nn.sigmoid(xn @ wg + bg)

    assert x.shape == (B, T, M) and x_norm.shape == (B, T, 1), "shape mismatch"
    assert jnp.allclose(x, ref, atol=1e-2, rtol=1e-2), "feature mismatch"
    assert jnp.allclose(x_norm, ref_norm, atol=1e-5), "norm mismatch"

    print("KERNEL_OK")
</pallas_src>

<mosaic_0001>
module attributes {stable_mosaic.version = 11 : i64} {
  func.func @time_encoder_kernel(%arg0: i32, %arg1: i32, %arg2: memref<1x8x16xf32, #tpu.memory_space<vmem>>, %arg3: memref<16x256xf32, #tpu.memory_space<vmem>>, %arg4: memref<1x256xf32, #tpu.memory_space<vmem>>, %arg5: memref<1x8x32xf32, #tpu.memory_space<vmem>>, %arg6: memref<1x8x1xf32, #tpu.memory_space<vmem>>) attributes {dimension_semantics = [#tpu.dimension_semantics<parallel>, #tpu.dimension_semantics<parallel>], iteration_bounds = array<i64: 2, 1>, scalar_prefetch = 0 : i64, scratch_operands = 0 : i64, tpu.core_type = #tpu.core_type<tc>, window_params = [{transform_indices = @transform_0, window_bounds = array<i64: 1, 8, 16>}, {pipeline_mode = #tpu.pipeline_mode<synchronous>, transform_indices = @transform_1, window_bounds = array<i64: 16, 256>}, {pipeline_mode = #tpu.pipeline_mode<synchronous>, transform_indices = @transform_2, window_bounds = array<i64: 1, 256>}, {transform_indices = @transform_3, window_bounds = array<i64: 1, 8, 32>}, {transform_indices = @transform_4, window_bounds = array<i64: 1, 8, 1>}]} {
    %c0 = arith.constant 0 : index
    %c0_0 = arith.constant 0 : index
    %c0_1 = arith.constant 0 : index
    %0 = vector.load %arg2[%c0, %c0_0, %c0_1] : memref<1x8x16xf32, #tpu.memory_space<vmem>>, vector<1x8x16xf32>
    %1 = vector.shape_cast %0 : vector<1x8x16xf32> to vector<8x16xf32>
    %2 = arith.mulf %1, %1 : vector<8x16xf32>
    %cst = arith.constant dense<0.000000e+00> : vector<8xf32>
    %3 = vector.multi_reduction <add>, %2, %cst [1] : vector<8x16xf32> to vector<8xf32>
    %4 = vector.shape_cast %3 : vector<8xf32> to vector<8x1xf32>
    %5 = math.sqrt %4 : vector<8x1xf32>
    %cst_2 = arith.constant 9.99999993E-9 : f32
    %6 = vector.broadcast %cst_2 : f32 to vector<8x1xf32>
    %7 = arith.addf %5, %6 : vector<8x1xf32>
    %cst_3 = arith.constant 1.000000e+00 : f32
    %8 = vector.broadcast %cst_3 : f32 to vector<8x1xf32>
    %9 = arith.divf %8, %7 : vector<8x1xf32>
    %10 = vector.broadcast %9 : vector<8x1xf32> to vector<8x16xf32>
    %11 = arith.mulf %1, %10 : vector<8x16xf32>
    %c0_4 = arith.constant 0 : index
    %c0_5 = arith.constant 0 : index
    %12 = vector.load %arg3[%c0_4, %c0_5] : memref<16x256xf32, #tpu.memory_space<vmem>>, vector<16x256xf32>
    %cst_6 = arith.constant dense<0.000000e+00> : vector<8x256xf32>
    %13 = tpu.matmul %11, %12, %cst_6 {dimension_numbers = #tpu.dot_dimension_numbers<[1], [0], [0], [1], [0, 0, 1, 1], [], []>} : vector<8x16xf32>, vector<16x256xf32>, vector<8x256xf32> -> vector<8x256xf32>
    %c0_7 = arith.constant 0 : index
    %c0_8 = arith.constant 0 : index
    %14 = vector.load %arg4[%c0_7, %c0_8] : memref<1x256xf32, #tpu.memory_space<vmem>>, vector<1x256xf32>
    %15 = vector.broadcast %14 : vector<1x256xf32> to vector<8x256xf32>
    %16 = arith.addf %13, %15 : vector<8x256xf32>
    %17 = vector.extract_strided_slice %16 {offsets = [0, 0], sizes = [8, 128], strides = [1, 1]} : vector<8x256xf32> to vector<8x128xf32>
    %cst_9 = arith.constant 0.000000e+00 : f32
    %18 = vector.broadcast %cst_9 : f32 to vector<8x128xf32>
    %19 = arith.maximumf %17, %18 : vector<8x128xf32>
    %20 = vector.extract_strided_slice %16 {offsets = [0, 128], sizes = [8, 128], strides = [1, 1]} : vector<8x256xf32> to vector<8x128xf32>
    %21 = arith.negf %20 : vector<8x128xf32>
    %22 = math.exp %21 : vector<8x128xf32>
    %cst_10 = arith.constant 1.000000e+00 : f32
    %23 = vector.broadcast %cst_10 : f32 to vector<8x128xf32>
    %24 = arith.addf %23, %22 : vector<8x128xf32>
    %25 = arith.divf %23, %24 : vector<8x128xf32>
    %26 = arith.mulf %19, %25 : vector<8x128xf32>
    %27 = vector.extract_strided_slice %26 {offsets = [0, 0], sizes = [8, 32], strides = [1, 1]} : vector<8x128xf32> to vector<8x32xf32>
    %c0_11 = arith.constant 0 : index
    %c0_12 = arith.constant 0 : index
    %c0_13 = arith.constant 0 : index
    %28 = vector.load %arg5[%c0_11, %c0_12, %c0_13] : memref<1x8x32xf32, #tpu.memory_space<vmem>>, vector<1x8x32xf32>
    %29 = vector.shape_cast %28 : vector<1x8x32xf32> to vector<8x32xf32>
    %30 = vector.shape_cast %27 : vector<8x32xf32> to vector<1x8x32xf32>
    tpu.vector_store %arg5[%c0_11, %c0_12, %c0_13], %30 {strides = array<i32>} : memref<1x8x32xf32, #tpu.memory_space<vmem>>, vector<1x8x32xf32>,
    %c0_14 = arith.constant 0 : index
    %c0_15 = arith.constant 0 : index
    %c0_16 = arith.constant 0 : index
    %31 = vector.load %arg6[%c0_14, %c0_15, %c0_16] : memref<1x8x1xf32, #tpu.memory_space<vmem>>, vector<1x8x1xf32>
    %32 = vector.shape_cast %31 : vector<1x8x1xf32> to vector<8x1xf32>
    %33 = vector.shape_cast %5 : vector<8x1xf32> to vector<1x8x1xf32>
    tpu.vector_store %arg6[%c0_14, %c0_15, %c0_16], %33 {strides = array<i32>} : memref<1x8x1xf32, #tpu.memory_space<vmem>>, vector<1x8x1xf32>,
    return
  }
  func.func @transform_0(%arg0: i32, %arg1: i32) -> (i32, i32, i32) {
    %c0_i32 = arith.constant 0 : i32
    %c0_i32_0 = arith.constant 0 : i32
    return %arg0, %arg1, %c0_i32 : i32, i32, i32
  }
  func.func @transform_1(%arg0: i32, %arg1: i32) -> (i32, i32) {
    %c0_i32 = arith.constant 0 : i32
    %c0_i32_0 = arith.constant 0 : i32
    %c0_i32_1 = arith.constant 0 : i32
    return %c0_i32, %c0_i32_0 : i32, i32
  }
  func.func @transform_2(%arg0: i32, %arg1: i32) -> (i32, i32) {
    %c0_i32 = arith.constant 0 : i32
    %c0_i32_0 = arith.constant 0 : i32
    %c0_i32_1 = arith.constant 0 : i32
    return %c0_i32, %c0_i32_0 : i32, i32
  }
  func.func @transform_3(%arg0: i32, %arg1: i32) -> (i32, i32, i32) {
    %c0_i32 = arith.constant 0 : i32
    %c0_i32_0 = arith.constant 0 : i32
    return %arg0, %arg1, %c0_i32 : i32, i32, i32
  }
  func.func @transform_4(%arg0: i32, %arg1: i32) -> (i32, i32, i32) {
    %c0_i32 = arith.constant 0 : i32
    %c0_i32_0 = arith.constant 0 : i32
    return %arg0, %arg1, %c0_i32 : i32, i32, i32
  }
}

</mosaic_0001>

<llo_original>
// kernel: tpu_custom_call.1
$region0: #{tpu_custom_call.1}
  #allocation0 [shape = 'u32[]', space=smem, size = 0x4, offset = 0x4, fixed_abs, tag = 'smem constant byte address 0x4 - core index']
  #allocation1 [shape = 'u32[144,128]{1,0:T(1,128)}', space=vmem, size = 0x12000, scoped, tag = 'internal scratch']
  %s0 = inlined_call_operand.hbm [shape: f32[2,8,16], index: 0, kind: input, shape index: {}]
  %s1 = inlined_call_operand.hbm [shape: f32[16,256], index: 1, kind: input, shape index: {}]
  %s2 = inlined_call_operand.vmem [shape: f32[1,256], index: 2, kind: input, shape index: {}]
  %s3 = inlined_call_operand.hbm [shape: f32[2,8,32], index: 3, kind: output, shape index: {0}]
  %s4 = inlined_call_operand.vmem [shape: f32[2,8,1], index: 4, kind: output, shape index: {1}]
  %5 = xla_tuple %s3, %s4
  %s6 = sld [smem:[#allocation0]]
  $region61: #{tpu_custom_call.1} parent=0
    _
  %s8 = ssub.s32 1, %s6
  %s9 = scalar_select 0, %s8, %s6
  $region1: #{tpu_custom_call.1} parent=0
    #allocation2 [shape = 'u8[8192]{0}', space=vmem, size = 0x2000, scoped, tag = 'input window, operand 0']
    #allocation3 [shape = 's32[2]{0}', space=sflag, size = 0x8, scoped, tag = 'scoped memory for tpu_custom_call.1']
    #allocation4 [shape = 's32[2]{0}', space=sflag, size = 0x8, scoped, tag = 'scoped memory for tpu_custom_call.1']
    #allocation5 [shape = 'u8[16384]{0}', space=vmem, size = 0x4000, scoped, tag = 'input window, operand 1, single buffered']
    #allocation6 [shape = 's32[1]{0}', space=sflag, size = 0x4, scoped, tag = 'scoped memory for tpu_custom_call.1']
    #allocation7 [shape = 'u8[8192]{0}', space=vmem, size = 0x2000, scoped, tag = 'output window, operand 0']
    %10 = vsyncpa [#allocation3], 0
    %s11 = scalar_lea.sflag [#allocation3], 1
    %12 = vsyncpa %s11, 0
    %13 = vsyncpa [#allocation6], 0
    %14 = vsyncpa [#allocation4], 0
    %s15 = scalar_lea.sflag [#allocation4], 1
    %16 = vsyncpa %s15, 0
    loop: start=0, step=1, limit=4
    $region2: #{tpu_custom_call.1} parent=1 // loop_pre_header
      _
    $region3: #{tpu_custom_call.1} parent=1 // loop_header
      %s18 = sphi 0, %s22
      %p19 = scmp.ge.s32.totalorder %s18, 4
      %s25 = sphi 0, %s37
      %s26 = sphi 0, %s33
      %s27 = sphi 0, %s25
      %s28 = sphi 0, %s26
      %s29 = sphi 0, %s27
      %s30 = sphi 0, %s28
      %s42 = sphi 0, %s44
      %s45 = sphi 0, %s42
      %s46 = sphi 0, %s45
      %s62 = sphi 0, %s46
      %s66 = sphi 0, %s66
      %s68 = sphi 0, %s66
      %s69 = sphi 0, %s68
      %s83 = sphi 0, %s69
      %s87 = sphi 0, %s87
      %s89 = sphi 0, %s87
      %s90 = sphi 0, %s89
      %s104 = sphi 0, %s90
      %s112 = sphi 0, %s114
      %s115 = sphi 0, %s112
      %s116 = sphi 0, %s115
      %s132 = sphi 0, %s116
      %s140 = sphi 0, %s142
      %s143 = sphi 0, %s140
      %s144 = sphi 0, %s143
      %s160 = sphi 0, %s144
    $region4: #{tpu_custom_call.1} parent=1 // loop_header_branch
      %21 = sbr.rel (%p19) target = $region8
    $region5: #{tpu_custom_call.1} parent=1 // loop_body
      %s23 = ssub.s32 %s18, 1
      %s24 = ssub.s32 %s18, 2
      %s31 = sadd.s32 1, %s26
      %p32 = scmp.ge.s32.totalorder %s31, 1
      %s33 = scalar_select %p32, 0, %s31
      %s34 = sadd.s32 1, %s25
      %s35 = scalar_select %p32, %s34, %s25
      %p36 = scmp.ge.s32.totalorder %s35, 2
      %s37 = scalar_select %p36, 0, %s35
      %s38 = ssub.s32 %s25, %s37
      %s39 = ssub.s32 %s26, %s33
      %s40 = sor.u32 %s38, %s39
      %p41 = scmp.eq.s32.totalorder %s40, 0
      %s43 = sadd.s32 %s42, 1
      %s44 = scalar_select %p41, %s42, %s43
      %p47 = pneg %p41
      %p48 = scmp.eq.s32.totalorder %s18, 1
      %p49 = por %p47, %p48
      %p50 = scmp.ne.s32.totalorder %s42, %s45
      %p51 = scmp.eq.s32.totalorder %s18, 0
      %p52 = por %p50, %p51
      %p53 = scmp.ne.s32.totalorder %s42, %s45
      %p54 = scmp.eq.s32.totalorder %s23, 1
      %p55 = por %p53, %p54
      %p56 = scmp.ne.s32.totalorder %s45, %s46
      %p57 = scmp.eq.s32.totalorder %s23, 0
      %p58 = por %p56, %p57
      %p59 = scmp.ne.s32.totalorder %s45, %s46
      %p60 = scmp.eq.s32.totalorder %s24, 1
      %p61 = por %p59, %p60
      %p63 = scmp.ne.s32.totalorder %s46, %s62
      %p64 = scmp.eq.s32.totalorder %s24, 0
      %p65 = por %p63, %p64
      %s67 = sadd.s32 %s66, 1
      %p70 = scmp.eq.s32.totalorder %s18, 1
      %p71 = scmp.ne.s32.totalorder %s66, %s68
      %p72 = scmp.eq.s32.totalorder %s18, 0
      %p73 = por %p71, %p72
      %p74 = scmp.ne.s32.totalorder %s66, %s68
      %p75 = scmp.eq.s32.totalorder %s23, 1
      %p76 = por %p74, %p75
      %p77 = scmp.ne.s32.totalorder %s68, %s69
      %p78 = scmp.eq.s32.totalorder %s23, 0
      %p79 = por %p77, %p78
      %p80 = scmp.ne.s32.totalorder %s68, %s69
      %p81 = scmp.eq.s32.totalorder %s24, 1
      %p82 = por %p80, %p81
      %p84 = scmp.ne.s32.totalorder %s69, %s83
      %p85 = scmp.eq.s32.totalorder %s24, 0
      %p86 = por %p84, %p85
      %s88 = sadd.s32 %s87, 1
      %p91 = scmp.eq.s32.totalorder %s18, 1
      %p92 = scmp.ne.s32.totalorder %s87, %s89
      %p93 = scmp.eq.s32.totalorder %s18, 0
      %p94 = por %p92, %p93
      %p95 = scmp.ne.s32.totalorder %s87, %s89
      %p96 = scmp.eq.s32.totalorder %s23, 1
      %p97 = por %p95, %p96
      %p98 = scmp.ne.s32.totalorder %s89, %s90
      %p99 = scmp.eq.s32.totalorder %s23, 0
      %p100 = por %p98, %p99
      %p101 = scmp.ne.s32.totalorder %s89, %s90
      %p102 = scmp.eq.s32.totalorder %s24, 1
      %p103 = por %p101, %p102
      %p105 = scmp.ne.s32.totalorder %s90, %s104
      %p106 = scmp.eq.s32.totalorder %s24, 0
      %p107 = por %p105, %p106
      %s108 = ssub.s32 %s25, %s37
      %s109 = ssub.s32 %s26, %s33
      %s110 = sor.u32 %s108, %s109
      %p111 = scmp.eq.s32.totalorder %s110, 0
      %s113 = sadd.s32 %s112, 1
      %s114 = scalar_select %p111, %s112, %s113
      %p117 = pneg %p111
      %p118 = scmp.eq.s32.totalorder %s18, 1
      %p119 = por %p117, %p118
      %p120 = scmp.ne.s32.totalorder %s112, %s115
      %p121 = scmp.eq.s32.totalorder %s18, 0
      %p122 = por %p120, %p121
      %p123 = scmp.ne.s32.totalorder %s112, %s115
      %p124 = scmp.eq.s32.totalorder %s23, 1
      %p125 = por %p123, %p124
      %p126 = scmp.ne.s32.totalorder %s115, %s116
      %p127 = scmp.eq.s32.totalorder %s23, 0
      %p128 = por %p126, %p127
      %p129 = scmp.ne.s32.totalorder %s115, %s116
      %p130 = scmp.eq.s32.totalorder %s24, 1
      %p131 = por %p129, %p130
      %p133 = scmp.ne.s32.totalorder %s116, %s132
      %p134 = scmp.eq.s32.totalorder %s24, 0
      %p135 = por %p133, %p134
      %s136 = ssub.s32 %s25, %s37
      %s137 = ssub.s32 %s26, %s33
      %s138 = sor.u32 %s136, %s137
      %p139 = scmp.eq.s32.totalorder %s138, 0
      %s141 = sadd.s32 %s140, 1
      %s142 = scalar_select %p139, %s140, %s141
      %p145 = pneg %p139
      %p146 = scmp.eq.s32.totalorder %s18, 1
      %p147 = por %p145, %p146
      %p148 = scmp.ne.s32.totalorder %s140, %s143
      %p149 = scmp.eq.s32.totalorder %s18, 0
      %p150 = por %p148, %p149
      %p151 = scmp.ne.s32.totalorder %s140, %s143
      %p152 = scmp.eq.s32.totalorder %s23, 1
      %p153 = por %p151, %p152
      %p154 = scmp.ne.s32.totalorder %s143, %s144
      %p155 = scmp.eq.s32.totalorder %s23, 0
      %p156 = por %p154, %p155
      %p157 = scmp.ne.s32.totalorder %s143, %s144
      %p158 = scmp.eq.s32.totalorder %s24, 1
      %p159 = por %p157, %p158
      %p161 = scmp.ne.s32.totalorder %s144, %s160
      %p162 = scmp.eq.s32.totalorder %s24, 0
      %p163 = por %p161, %p162
      %p164 = scmp.le.s32.totalorder 1, %s18
      %p165 = scmp.lt.s32.totalorder %s18, 3
      %p166 = pnand %p164, %p165
      %p167 = pneg %p166
      // Predicated region
      $region9: #{tpu_custom_call.1} parent=5 // pred_check
        _
      $region10: #{tpu_custom_call.1} parent=5 // pred_check_branch
        %169 = sbr.rel (%p166) target = $region12
      $region11: #{tpu_custom_call.1} parent=5 // pred_region
        %s170 = ssub.s32 %s18, 1
        // Predicated region
        $region13: #{tpu_custom_call.1} parent=11 // pred_check
          %p171 = pneg %p79
        $region14: #{tpu_custom_call.1} parent=11 // pred_check_branch
          %173 = sbr.rel (%p171) target = $region16
        $region15: #{tpu_custom_call.1} parent=11 // pred_region
          %s175 = ssub.s32 512, 512
          %176 = vsyncadd [#allocation6], %s175
          %s177 = sshll.u32 [#allocation5], 4
          %s178 = int_to_ptr.vmem [resolvable:$true] %s177
          %183 = dma.hbm_to_vmem [thread:$0]  %s1, 512, %s178, [#allocation6], 256, 256, 16
        $region16: #{tpu_custom_call.1} parent=11 // pred_fallthru
          _
        // Predicated region
        $region17: #{tpu_custom_call.1} parent=11 // pred_check
          %p184 = pneg %p100
        $region18: #{tpu_custom_call.1} parent=11 // pred_check_branch
          %186 = sbr.rel (%p184) target = $region20
        $region19: #{tpu_custom_call.1} parent=11 // pred_region
          _
        $region20: #{tpu_custom_call.1} parent=11 // pred_fallthru
          _
      $region12: #{tpu_custom_call.1} parent=5 // pred_fallthru
        _
      %p187 = scmp.lt.s32.totalorder %s18, 2
      // Predicated region
      $region21: #{tpu_custom_call.1} parent=5 // pred_check
        %p188 = pneg %p187
      $region22: #{tpu_custom_call.1} parent=5 // pred_check_branch
        %190 = sbr.rel (%p188) target = $region24
      $region23: #{tpu_custom_call.1} parent=5 // pred_region
        // Predicated region
        $region25: #{tpu_custom_call.1} parent=23 // pred_check
          %p191 = pneg %p52
        $region26: #{tpu_custom_call.1} parent=23 // pred_check_branch
          %193 = sbr.rel (%p191) target = $region28
        $region27: #{tpu_custom_call.1} parent=23 // pred_region
          %s194 = sand.u32 %s42, 1
          %s195 = scalar_lea.sflag [#allocation3], %s194
          %s196 = sand.u32 %s42, 1
          %s197 = smul.addr %s196, 8
          %s198 = scalar_lea.vmem [#allocation2], %s197
          %s200 = ssub.s32 128, 128
          %201 = vsyncadd %s195, %s200
          %s202 = sadd.s32 %s26, %s25
          %s203 = smul.addr %s202, 128
          %s204 = scalar_lea.hbm %s0, %s203
          %s206 = sshll.u32 %s198, 4
          %s207 = int_to_ptr.vmem [resolvable:$true] %s206
          %209 = dma.hbm_to_vmem [thread:$0]  %s204, 128, %s207, %s195
        $region28: #{tpu_custom_call.1} parent=23 // pred_fallthru
          _
      $region24: #{tpu_custom_call.1} parent=5 // pred_fallthru
        _
      %p210 = scmp.le.s32.totalorder 1, %s18
      %p211 = scmp.lt.s32.totalorder %s18, 3
      %p212 = pnand %p210, %p211
      %p213 = pneg %p212
      // Predicated region
      $region29: #{tpu_custom_call.1} parent=5 // pred_check
        _
      $region30: #{tpu_custom_call.1} parent=5 // pred_check_branch
        %215 = sbr.rel (%p212) target = $region32
      $region31: #{tpu_custom_call.1} parent=5 // pred_region
        %s216 = ssub.s32 %s18, 1
        %s217 = sand.u32 %s45, 1
        %s218 = scalar_lea.sflag [#allocation3], %s217
        %s219 = sand.u32 %s45, 1
        %s220 = smul.addr %s219, 8
        %s221 = scalar_lea.vmem [#allocation2], %s220
        // Predicated region
        $region33: #{tpu_custom_call.1} parent=31 // pred_check
          %p222 = pneg %p58
        $region34: #{tpu_custom_call.1} parent=31 // pred_check_branch
          %224 = sbr.rel (%p222) target = $region36
        $region35: #{tpu_custom_call.1} parent=31 // pred_region
          %225 = dma.done %s218, 128
        $region36: #{tpu_custom_call.1} parent=31 // pred_fallthru
          _
        // Predicated region
        $region37: #{tpu_custom_call.1} parent=31 // pred_check
          %p226 = pneg %p79
        $region38: #{tpu_custom_call.1} parent=31 // pred_check_branch
          %228 = sbr.rel (%p226) target = $region40
        $region39: #{tpu_custom_call.1} parent=31 // pred_region
          %229 = dma.done [#allocation6], 512
        $region40: #{tpu_custom_call.1} parent=31 // pred_fallthru
          _
        %s230 = sand.u32 %s45, 1
        %s231 = scalar_lea.sflag [#allocation3], %s230
        %s232 = sand.u32 %s45, 1
        %s233 = smul.addr %s232, 8
        %s234 = scalar_lea.vmem [#allocation2], %s233
        %p235 = pneg %p58
        %p236 = pneg %p55
        %p237 = pneg %p79
        %p238 = pneg %p76
        %p239 = pneg %p100
        %p240 = pneg %p97
        %p241 = pneg %p128
        %p242 = pneg %p125
        %s243 = sand.u32 %s115, 1
        %s244 = scalar_lea.sflag [#allocation4], %s243
        %s245 = sand.u32 %s115, 1
        %s246 = smul.addr %s245, 8
        %s247 = scalar_lea.vmem [#allocation7], %s246
        %p248 = pneg %p156
        %p249 = pneg %p153
        %p250 = scmp.lt.s32.totalorder %s27, 1
        %s251 = scalar_select %p250, %s27, 1
        %p252 = scmp.lt.s32.totalorder %s28, 0
        %s253 = scalar_select %p252, %s28, 0
        %s254 = sadd.s32 %s253, %s251
        %s255 = smul.addr %s254, 8
        %s256 = scalar_lea.vmem %s4, %s255
        %p257 = scmp.lt.s32.totalorder %s27, 1
        %s258 = scalar_select %p257, %s27, 1
        %p259 = scmp.lt.s32.totalorder %s28, 0
        %s260 = scalar_select %p259, %s28, 0
        %s261 = sadd.s32 %s260, %s258
        %s262 = smul.addr %s261, 8
        %s263 = scalar_lea.vmem %s4, %s262
        %v264 = vld [vmem:[%s221] sm:$0xff]
        %v265 = vmul.f32 %v264, %v264
        %vm266 = vcmask 130048
        %v267 = vsel %vm266, %v265, 0.0
        %268 = vadd.xlane.f32.xlu0 %v267
        %v269 = vpop.xlane.xlu0 %268
        %v270 = vrsqrt.pop %v269
        %v271 = vmul.f32 %v269, %v270
        %vm272 = vcmp.eq.f32.partialorder %v269, inf
        %v273 = vsel %vm272, %v269, %v271
        %vm274 = vcmp.eq.f32.partialorder %v269, 0.0
        %v275 = vand.u32 %v269, 2147483648
        %v276 = vsel %vm274, %v275, %v273
        %v277 = vadd.f32 %v276, 1e-08
        %v278 = vrcp.pop %v277
        %v279 = vmul.f32 1.0, %v278
        %v280 = vmul.f32 %v264, %v279
        %v281 = vld [vmem:[#allocation5] sm:$0xff]
        %v282 = vld [vmem:[#allocation5 + $0x8] sm:$0xff]
        %v283 = vld [vmem:[#allocation5 + $0x10] sm:$0xff]
        %v284 = vld [vmem:[#allocation5 + $0x18] sm:$0xff]
        %v285 = vld [vmem:[%s2] sm:$0x3]
        %v287 = vlaneseq
        %v288 = vshrl.u32 %v287, 7
        %v289 = vsub.s32 0, %v288
        %v290 = vrot.slane %v285, %v289
        %v291 = vlaneseq
        %v292 = vshrl.u32 %v291, 7
        %v293 = vsub.s32 1, %v292
        %v294 = vrot.slane %v285, %v293
        %v298 = vsel %vm266, %v280, 0
        %300 = vmatprep.subr.mxu0 %v282
        %301 = vmatpush1.msra.mxu0 %v281
        %302 = vmatprep.subr.mxu0 %v284
        %303 = vmatpush1.msra.mxu0 %v283
        %304 = vmatprep.subr.mxu0 0.0
        %305 = vmatpush1.msra.mxu0 0.0
        %306 = vmatprep.subr.mxu0 0.0
        %307 = vmatpush1.msra.mxu0 0.0
        %308 = vmatprep.subr.mxu0 0.0
        %309 = vmatpush1.msra.mxu0 0.0
        %310 = vmatprep.subr.mxu0 0.0
        %311 = vmatpush1.msra.mxu0 0.0
        %312 = vmatprep.subr.mxu0 0.0
        %313 = vmatpush1.msra.mxu0 0.0
        %314 = vmatprep.subr.mxu0 0.0
        %315 = vmatpush1.msra.mxu0 0.0
        %316 = vmatprep.subr.mxu0 0.0
        %317 = vmatpush1.msra.mxu0 0.0
        %318 = vmatprep.subr.mxu0 0.0
        %319 = vmatpush1.msra.mxu0 0.0
        %320 = vmatprep.subr.mxu0 0.0
        %321 = vmatpush1.msra.mxu0 0.0
        %322 = vmatprep.subr.mxu0 0.0
        %323 = vmatpush1.msra.mxu0 0.0
        %324 = vmatprep.subr.mxu0 0.0
        %325 = vmatpush1.msra.mxu0 0.0
        %326 = vmatprep.subr.mxu0 0.0
        %327 = vmatpush1.msra.mxu0 0.0
        %328 = vmatprep.subr.mxu0 0.0
        %329 = vmatpush1.msra.mxu0 0.0
        %330 = vmatprep.subr.mxu0 0.0
        %331 = vmatpush1.msra.mxu0 0.0
        %332 = vmatprep.subr.mxu0 0.0
        %333 = vmatpush1.msra.mxu0 0.0
        %334 = vmatprep.subr.mxu0 0.0
        %335 = vmatpush1.msra.mxu0 0.0
        %336 = vmatprep.subr.mxu0 0.0
        %337 = vmatpush1.msra.mxu0 0.0
        %338 = vmatprep.subr.mxu0 0.0
        %339 = vmatpush1.msra.mxu0 0.0
        %340 = vmatprep.subr.mxu0 0.0
        %341 = vmatpush1.msra.mxu0 0.0
        %342 = vmatprep.subr.mxu0 0.0
        %343 = vmatpush1.msra.mxu0 0.0
        %344 = vmatprep.subr.mxu0 0.0
        %345 = vmatpush1.msra.mxu0 0.0
        %346 = vmatprep.subr.mxu0 0.0
        %347 = vmatpush1.msra.mxu0 0.0
        %348 = vmatprep.subr.mxu0 0.0
        %349 = vmatpush1.msra.mxu0 0.0
        %350 = vmatprep.subr.mxu0 0.0
        %351 = vmatpush1.msra.mxu0 0.0
        %352 = vmatprep.subr.mxu0 0.0
        %353 = vmatpush1.msra.mxu0 0.0
        %354 = vmatprep.subr.mxu0 0.0
        %355 = vmatpush1.msra.mxu0 0.0
        %356 = vmatprep.subr.mxu0 0.0
        %357 = vmatpush1.msra.mxu0 0.0
        %358 = vmatprep.subr.mxu0 0.0
        %359 = vmatpush1.msra.mxu0 0.0
        %360 = vmatprep.subr.mxu0 0.0
        %361 = vmatpush1.msra.mxu0 0.0
        %362 = vmatprep.subr.mxu0 0.0
        %363 = vmatpush1.msra.mxu0 0.0
        %364 = vmatprep.mubr.f32.mxu0 0.0
        %365 = vmatmul.mubr.f32.gmra.mrb[0].mxu0 %v298
        %v366 = vpop.f32.mrb[0].mxu0
        %v367 = vadd.f32 %v290, %v366
        %v368 = vpop.f32.mrb[0].mxu0
        %v369 = vadd.f32 %v294, %v368
        %370 = vdwg.mxu0
        %v371 = vmax.f32 %v367, 0.0
        %v372 = vxor.u32 %v369, 2147483648
        %v373 = vmul.f32 %v372, 1.442695
        %v374 = vpow.pop %v373
        %v375 = vadd.f32 %v374, 1.0
        %v376 = vrcp.pop %v375
        %v377 = vmul.f32 1.0, %v376
        %v378 = vmul.f32 %v371, %v377
        %vm379 = vcmask 261120
        %380 = vst.msk [vmem:[%s247] sm:$0xff] %vm379, %v378
        %vm381 = vcmask 7168
        %382 = vst.msk [vmem:[%s263] sm:$0xff] %vm381, %v276
        %s383 = sand.u32 %s115, 1
        %s384 = scalar_lea.sflag [#allocation4], %s383
        %s385 = sand.u32 %s115, 1
        %s386 = smul.addr %s385, 8
        %s387 = scalar_lea.vmem [#allocation7], %s386
        %p388 = scmp.lt.s32.totalorder %s27, 1
        %s389 = scalar_select %p388, %s27, 1
        %p390 = scmp.lt.s32.totalorder %s28, 0
        %s391 = scalar_select %p390, %s28, 0
        %s392 = sadd.s32 %s391, %s389
        %s393 = smul.addr %s392, 8
        %s394 = scalar_lea.vmem %s4, %s393
        // Predicated region
        $region41: #{tpu_custom_call.1} parent=31 // pred_check
          %p395 = pneg %p125
        $region42: #{tpu_custom_call.1} parent=31 // pred_check_branch
          %397 = sbr.rel (%p395) target = $region44
        $region43: #{tpu_custom_call.1} parent=31 // pred_region
          %s399 = ssub.s32 128, 128
          %400 = vsyncadd %s384, %s399
          %s401 = sadd.s32 %s28, %s27
          %s402 = smul.addr %s401, 128
          %s403 = scalar_lea.hbm %s3, %s402
          %s405 = sshll.u32 %s387, 4
          %s406 = int_to_ptr.vmem [resolvable:$true] %s405
          %408 = dma.vmem_to_hbm [thread:$0]  %s406, 128, %s403, %s384
        $region44: #{tpu_custom_call.1} parent=31 // pred_fallthru
          _
        // Predicated region
        $region45: #{tpu_custom_call.1} parent=31 // pred_check
          %p409 = pneg %p153
        $region46: #{tpu_custom_call.1} parent=31 // pred_check_branch
          %411 = sbr.rel (%p409) target = $region48
        $region47: #{tpu_custom_call.1} parent=31 // pred_region
          _
        $region48: #{tpu_custom_call.1} parent=31 // pred_fallthru
          _
      $region32: #{tpu_custom_call.1} parent=5 // pred_fallthru
        _
      %p412 = scmp.le.s32.totalorder 2, %s18
      // Predicated region
      $region49: #{tpu_custom_call.1} parent=5 // pred_check
        %p413 = pneg %p412
      $region50: #{tpu_custom_call.1} parent=5 // pred_check_branch
        %415 = sbr.rel (%p413) target = $region52
      $region51: #{tpu_custom_call.1} parent=5 // pred_region
        %s416 = ssub.s32 %s18, 2
        // Predicated region
        $region53: #{tpu_custom_call.1} parent=51 // pred_check
          %p417 = pneg %p131
        $region54: #{tpu_custom_call.1} parent=51 // pred_check_branch
          %419 = sbr.rel (%p417) target = $region56
        $region55: #{tpu_custom_call.1} parent=51 // pred_region
          %s420 = sand.u32 %s116, 1
          %s421 = scalar_lea.sflag [#allocation4], %s420
          %s422 = sand.u32 %s116, 1
          %s423 = smul.addr %s422, 8
          %s424 = scalar_lea.vmem [#allocation7], %s423
          %425 = dma.done %s421, 128
        $region56: #{tpu_custom_call.1} parent=51 // pred_fallthru
          _
        // Predicated region
        $region57: #{tpu_custom_call.1} parent=51 // pred_check
          %p426 = pneg %p159
        $region58: #{tpu_custom_call.1} parent=51 // pred_check_branch
          %428 = sbr.rel (%p426) target = $region60
        $region59: #{tpu_custom_call.1} parent=51 // pred_region
          %p429 = scmp.lt.s32.totalorder %s29, 1
          %s430 = scalar_select %p429, %s29, 1
          %p431 = scmp.lt.s32.totalorder %s30, 0
          %s432 = scalar_select %p431, %s30, 0
          %s433 = sadd.s32 %s432, %s430
          %s434 = smul.addr %s433, 8
          %s435 = scalar_lea.vmem %s4, %s434
        $region60: #{tpu_custom_call.1} parent=51 // pred_fallthru
          _
      $region52: #{tpu_custom_call.1} parent=5 // pred_fallthru
        _
    $region6: #{tpu_custom_call.1} parent=1 // loop_footer
      %s22 = sadd.s32 1, %s18
    $region7: #{tpu_custom_call.1} parent=1 // loop_footer_branch
      %17 = sbr.rel target = $region3
    $region8: #{tpu_custom_call.1} parent=1 // loop_exit
      _
    %436 = vsyncpa [#allocation3], 1
    %s437 = scalar_lea.sflag [#allocation3], 1
    %438 = vsyncpa %s437, 1
    %439 = vsyncpa [#allocation6], 1
    %440 = vsyncpa [#allocation4], 1
    %s441 = scalar_lea.sflag [#allocation4], 1
    %442 = vsyncpa %s441, 1

</llo_original>
